<compile_context>
chip_gen: v7x
topology: tpu7x:2x2x1
jax: 0.10.0
libtpu: 0.0.40
codegen_flags: <defaults>
</compile_context>

<pallas_src>
import functools

import jax
import jax.numpy as jnp
import numpy as np
from jax.experimental import pallas as pl
from jax.experimental.pallas import tpu as pltpu


def _round_up(a, m):
    return ((a + m - 1) // m) * m


def _coupling_kernel(n_linears, compute_dtype, omask_ref, x_ref, w0_ref, b0_ref, *refs):
    """One batch tile (batch in the lane dim). Runs both MLPs fully in VMEM."""
    n_rest = n_linears - 1
    s_params = refs[: 2 * n_rest]
    t_params = refs[2 * n_rest : 4 * n_rest]
    u_ref = refs[4 * n_rest]
    logs_ref = refs[4 * n_rest + 1]

    x = x_ref[...]                # (D, tb) f32, batch is lane-dense
    omask = omask_ref[...]        # (D, 1)  f32 == (1 - mask)

    # Fused, mask-folded layer 0 for both nets: one MXU push instead of two.
    h0 = jnp.dot(w0_ref[...], x.astype(compute_dtype),
                 preferred_element_type=jnp.float32) + b0_ref[...]   # (2H, tb) f32
    H = h0.shape[0] // 2
    hs = h0[:H]                   # s_net branch
    ht = h0[H:]                   # t_net branch

    # s_net tail: (Tanh -> Linear) repeated
    for i in range(n_rest):
        hs = jnp.tanh(hs)
        W = s_params[2 * i][...]
        b = s_params[2 * i + 1][...]
        hs = jnp.dot(W, hs.astype(compute_dtype),
                     preferred_element_type=jnp.float32) + b

    # t_net tail: (ReLU -> Linear) repeated
    for i in range(n_rest):
        ht = jnp.maximum(ht, 0.0)
        W = t_params[2 * i][...]
        b = t_params[2 * i + 1][...]
        ht = jnp.dot(W, ht.astype(compute_dtype),
                     preferred_element_type=jnp.float32) + b

    log_s = jnp.tanh(hs) * omask          # (D, tb)
    t = ht * omask
    u_ref[...] = x * jnp.exp(log_s) + t
    logs_ref[...] = log_s


def linear_masked_coupling_forward(x, mask, s_params, t_params, *, tb=256,
                                   compute_dtype=jnp.float32):
    """x: (B, D) f32; mask: (D,) f32 (0/1).
    s_params / t_params: flat lists [W0, b0, W1, b1, ...] with W in PyTorch
    nn.Linear layout (out_features, in_features) and b (out_features,).
    compute_dtype: dtype fed to the MXU (f32, or bf16 on v6e/v7x)."""
    B, D = x.shape
    n_linears = len(s_params) // 2
    assert n_linears >= 1 and len(t_params) == len(s_params)

    mask_f = mask.astype(jnp.float32).reshape(D)
    one_minus_mask = (1.0 - mask_f).reshape(D, 1)

    # ---- one-time constant parameter prep (XLA constant-folds this) ----
    # Fold mask into layer-0 weight columns and fuse s/t layer-0 along the out dim.
    W0s = s_params[0].astype(jnp.float32) * mask_f[None, :]
    W0t = t_params[0].astype(jnp.float32) * mask_f[None, :]
    w0_fused = jnp.concatenate([W0s, W0t], axis=0).astype(compute_dtype)      # (2H, D)
    b0_fused = jnp.concatenate(
        [s_params[1].reshape(-1), t_params[1].reshape(-1)], axis=0
    ).astype(jnp.float32).reshape(-1, 1)                                      # (2H, 1)

    def prep_rest(params):
        out = []
        for i in range(1, n_linears):
            out.append(params[2 * i].astype(compute_dtype))                   # (out, in)
            out.append(params[2 * i + 1].astype(jnp.float32).reshape(-1, 1))  # (out, 1)
        return out

    s_rest = prep_rest(s_params)
    t_rest = prep_rest(t_params)

    # ---- lane-dense layout: batch lives in the lane (last) dim ----
    tb = max(128, _round_up(tb, 128))          # keep stores unmasked (multiple of 128)
    tb_eff = min(tb, _round_up(B, 128))        # don't over-tile tiny batches
    B_pad = _round_up(B, tb_eff)
    xT = jnp.transpose(x.astype(jnp.float32))  # (D, B) — layout plumbing in the wrapper
    if B_pad != B:
        xT = jnp.pad(xT, ((0, 0), (0, B_pad - B)))

    grid = (B_pad // tb_eff,)

    # Whole-array blocks for mask/weights/biases (replicated across the batch grid),
    # batch-tiled lane-dense blocks for x and the outputs.
    def full_spec(a):
        return pl.BlockSpec(a.shape, lambda i: (0,) * a.ndim)

    batch_spec = pl.BlockSpec((D, tb_eff), lambda i: (0, i))

    in_specs = [full_spec(one_minus_mask), batch_spec,
                full_spec(w0_fused), full_spec(b0_fused)]
    in_specs += [full_spec(a) for a in s_rest]
    in_specs += [full_spec(a) for a in t_rest]

    out_specs = [batch_spec, batch_spec]
    out_shape = (
        jax.ShapeDtypeStruct((D, B_pad), jnp.float32),
        jax.ShapeDtypeStruct((D, B_pad), jnp.float32),
    )

    kernel = functools.partial(_coupling_kernel, n_linears, compute_dtype)

    # NOTE: the constant-index weight/bias/mask blocks are tiny here; if hidden_size
    # grows under v7x's 64 MiB VMEM, single-buffer them via pipeline_mode=pl.Buffered(1).
    uT, log_sT = pl.pallas_call(
        kernel,
        grid_spec=pltpu.PrefetchScalarGridSpec(
            num_scalar_prefetch=0,
            grid=grid,
            in_specs=in_specs,
            out_specs=out_specs,
        ),
        out_shape=out_shape,
        compiler_params=pltpu.CompilerParams(
            dimension_semantics=("parallel",)
        ),
    )(one_minus_mask, xT, w0_fused, b0_fused, *s_rest, *t_rest)

    u = jnp.transpose(uT[:, :B])
    log_s = jnp.transpose(log_sT[:, :B])
    return u, log_s


def _reference_forward(x, mask, s_params, t_params):
    """Pure-JAX reference mirroring the PyTorch module (y=None), PyTorch W layout."""
    n_linears = len(s_params) // 2
    mx = x * mask

    def mlp(params, act):
        h = mx
        for i in range(n_linears):
            if i > 0:
                h = act(h)
            W, b = params[2 * i], params[2 * i + 1]
            h = h @ W.T + b
        return h

    s = mlp(s_params, jnp.tanh)
    t = mlp(t_params, lambda z: jnp.maximum(z, 0.0)) * (1.0 - mask)
    log_s = jnp.tanh(s) * (1.0 - mask)
    u = x * jnp.exp(log_s) + t
    return u, log_s


def _init_mlp(key, sizes):
    """nn.Linear-style init, PyTorch layout: W (out, in) ~ U(±1/sqrt(fan_in))."""
    params = []
    for fan_in, fan_out in zip(sizes[:-1], sizes[1:]):
        key, kw, kb = jax.random.split(key, 3)
        bound = 1.0 / np.sqrt(fan_in)
        W = jax.random.uniform(kw, (fan_out, fan_in), jnp.float32, -bound, bound)
        b = jax.random.uniform(kb, (fan_out,), jnp.float32, -bound, bound)
        params += [W, b]
    return key, params


if __name__ == "__main__":
    # Small shapes consistent with the module (MAF-style coupling on flat features).
    B = 16            # batch
    input_size = 16   # feature dim D
    hidden_size = 32  # hidden width
    n_hidden = 2      # extra hidden Linear layers

    key = jax.random.PRNGKey(0)
    key, kx = jax.random.split(key)
    x = jax.random.normal(kx, (B, input_size), dtype=jnp.float32)

    # Alternating binary mask, standard for RealNVP coupling layers.
    mask = jnp.asarray(np.arange(input_size) % 2, dtype=jnp.float32)

    # s_net / t_net layer sizes: in -> h -> h*(n_hidden) -> in
    sizes = [input_size] + [hidden_size] * (n_hidden + 1) + [input_size]
    key, s_params = _init_mlp(key, sizes)
    key, t_params = _init_mlp(key, sizes)

    # f32 path (strict check)
    u, log_s = linear_masked_coupling_forward(x, mask, s_params, t_params)
    u = jax.block_until_ready(u)
    log_s = jax.block_until_ready(log_s)
    u_ref, log_s_ref = _reference_forward(x, mask, s_params, t_params)
    np.testing.assert_allclose(np.asarray(u), np.asarray(u_ref), rtol=1e-5, atol=1e-5)
    np.testing.assert_allclose(np.asarray(log_s), np.asarray(log_s_ref), rtol=1e-5, atol=1e-5)

    # Ragged batch: exercises the pad-to-lane-multiple path and a multi-step grid.
    B2 = 200
    key, kx2 = jax.random.split(key)
    x2 = jax.random.normal(kx2, (B2, input_size), dtype=jnp.float32)
    u2, log_s2 = linear_masked_coupling_forward(x2, mask, s_params, t_params, tb=128)
    jax.block_until_ready(u2)
    u2_ref, log_s2_ref = _reference_forward(x2, mask, s_params, t_params)
    np.testing.assert_allclose(np.asarray(u2), np.asarray(u2_ref), rtol=1e-5, atol=1e-5)
    np.testing.assert_allclose(np.asarray(log_s2), np.asarray(log_s2_ref), rtol=1e-5, atol=1e-5)

    # bf16 MXU path (v6e/v7x) — f32 accumulation, loose tolerance on bf16 weights.
    u3, log_s3 = linear_masked_coupling_forward(x, mask, s_params, t_params,
                                                compute_dtype=jnp.bfloat16)
    jax.block_until_ready(u3)
    np.testing.assert_allclose(np.asarray(u3), np.asarray(u_ref), rtol=1e-1, atol=1e-1)
    np.testing.assert_allclose(np.asarray(log_s3), np.asarray(log_s_ref), rtol=1e-1, atol=1e-1)

    # TODO(synk): conditional path (y / cond_label_size) not implemented; module default is None.
    print("KERNEL_OK")
</pallas_src>

<mosaic_0001>
module attributes {stable_mosaic.version = 11 : i64} {
  func.func @_coupling_kernel(%arg0: i32, %arg1: memref<16x1xf32, #tpu.memory_space<vmem>>, %arg2: memref<16x128xf32, #tpu.memory_space<vmem>>, %arg3: memref<64x16xf32, #tpu.memory_space<vmem>>, %arg4: memref<64x1xf32, #tpu.memory_space<vmem>>, %arg5: memref<32x32xf32, #tpu.memory_space<vmem>>, %arg6: memref<32x1xf32, #tpu.memory_space<vmem>>, %arg7: memref<32x32xf32, #tpu.memory_space<vmem>>, %arg8: memref<32x1xf32, #tpu.memory_space<vmem>>, %arg9: memref<16x32xf32, #tpu.memory_space<vmem>>, %arg10: memref<16x1xf32, #tpu.memory_space<vmem>>, %arg11: memref<32x32xf32, #tpu.memory_space<vmem>>, %arg12: memref<32x1xf32, #tpu.memory_space<vmem>>, %arg13: memref<32x32xf32, #tpu.memory_space<vmem>>, %arg14: memref<32x1xf32, #tpu.memory_space<vmem>>, %arg15: memref<16x32xf32, #tpu.memory_space<vmem>>, %arg16: memref<16x1xf32, #tpu.memory_space<vmem>>, %arg17: memref<16x128xf32, #tpu.memory_space<vmem>>, %arg18: memref<16x128xf32, #tpu.memory_space<vmem>>) attributes {dimension_semantics = [#tpu.dimension_semantics<parallel>], iteration_bounds = array<i64: 1>, scalar_prefetch = 0 : i64, scratch_operands = 0 : i64, tpu.core_type = #tpu.core_type<tc>, window_params = [{pipeline_mode = #tpu.pipeline_mode<synchronous>, transform_indices = @transform_0, window_bounds = array<i64: 16, 1>}, {transform_indices = @transform_1, window_bounds = array<i64: 16, 128>}, {pipeline_mode = #tpu.pipeline_mode<synchronous>, transform_indices = @transform_2, window_bounds = array<i64: 64, 16>}, {pipeline_mode = #tpu.pipeline_mode<synchronous>, transform_indices = @transform_3, window_bounds = array<i64: 64, 1>}, {pipeline_mode = #tpu.pipeline_mode<synchronous>, transform_indices = @transform_4, window_bounds = array<i64: 32, 32>}, {pipeline_mode = #tpu.pipeline_mode<synchronous>, transform_indices = @transform_5, window_bounds = array<i64: 32, 1>}, {pipeline_mode = #tpu.pipeline_mode<synchronous>, transform_indices = @transform_6, window_bounds = array<i64: 32, 32>}, {pipeline_mode = #tpu.pipeline_mode<synchronous>, transform_indices = @transform_7, window_bounds = array<i64: 32, 1>}, {pipeline_mode = #tpu.pipeline_mode<synchronous>, transform_indices = @transform_8, window_bounds = array<i64: 16, 32>}, {pipeline_mode = #tpu.pipeline_mode<synchronous>, transform_indices = @transform_9, window_bounds = array<i64: 16, 1>}, {pipeline_mode = #tpu.pipeline_mode<synchronous>, transform_indices = @transform_10, window_bounds = array<i64: 32, 32>}, {pipeline_mode = #tpu.pipeline_mode<synchronous>, transform_indices = @transform_11, window_bounds = array<i64: 32, 1>}, {pipeline_mode = #tpu.pipeline_mode<synchronous>, transform_indices = @transform_12, window_bounds = array<i64: 32, 32>}, {pipeline_mode = #tpu.pipeline_mode<synchronous>, transform_indices = @transform_13, window_bounds = array<i64: 32, 1>}, {pipeline_mode = #tpu.pipeline_mode<synchronous>, transform_indices = @transform_14, window_bounds = array<i64: 16, 32>}, {pipeline_mode = #tpu.pipeline_mode<synchronous>, transform_indices = @transform_15, window_bounds = array<i64: 16, 1>}, {transform_indices = @transform_16, window_bounds = array<i64: 16, 128>}, {transform_indices = @transform_17, window_bounds = array<i64: 16, 128>}]} {
    %c0 = arith.constant 0 : index
    %c0_0 = arith.constant 0 : index
    %0 = vector.load %arg2[%c0, %c0_0] : memref<16x128xf32, #tpu.memory_space<vmem>>, vector<16x128xf32>
    %c0_1 = arith.constant 0 : index
    %c0_2 = arith.constant 0 : index
    %1 = vector.load %arg1[%c0_1, %c0_2] : memref<16x1xf32, #tpu.memory_space<vmem>>, vector<16x1xf32>
    %c0_3 = arith.constant 0 : index
    %c0_4 = arith.constant 0 : index
    %2 = vector.load %arg3[%c0_3, %c0_4] : memref<64x16xf32, #tpu.memory_space<vmem>>, vector<64x16xf32>
    %cst = arith.constant dense<0.000000e+00> : vector<64x128xf32>
    %3 = tpu.matmul %2, %0, %cst {dimension_numbers = #tpu.dot_dimension_numbers<[1], [0], [0], [1], [0, 0, 1, 1], [], []>} : vector<64x16xf32>, vector<16x128xf32>, vector<64x128xf32> -> vector<64x128xf32>
    %c0_5 = arith.constant 0 : index
    %c0_6 = arith.constant 0 : index
    %4 = vector.load %arg4[%c0_5, %c0_6] : memref<64x1xf32, #tpu.memory_space<vmem>>, vector<64x1xf32>
    %5 = vector.broadcast %4 : vector<64x1xf32> to vector<64x128xf32>
    %6 = arith.addf %3, %5 : vector<64x128xf32>
    %7 = vector.extract_strided_slice %6 {offsets = [0, 0], sizes = [32, 128], strides = [1, 1]} : vector<64x128xf32> to vector<32x128xf32>
    %8 = vector.extract_strided_slice %6 {offsets = [32, 0], sizes = [32, 128], strides = [1, 1]} : vector<64x128xf32> to vector<32x128xf32>
    %9 = math.tanh %7 : vector<32x128xf32>
    %c0_7 = arith.constant 0 : index
    %c0_8 = arith.constant 0 : index
    %10 = vector.load %arg5[%c0_7, %c0_8] : memref<32x32xf32, #tpu.memory_space<vmem>>, vector<32x32xf32>
    %c0_9 = arith.constant 0 : index
    %c0_10 = arith.constant 0 : index
    %11 = vector.load %arg6[%c0_9, %c0_10] : memref<32x1xf32, #tpu.memory_space<vmem>>, vector<32x1xf32>
    %cst_11 = arith.constant dense<0.000000e+00> : vector<32x128xf32>
    %12 = tpu.matmul %10, %9, %cst_11 {dimension_numbers = #tpu.dot_dimension_numbers<[1], [0], [0], [1], [0, 0, 1, 1], [], []>} : vector<32x32xf32>, vector<32x128xf32>, vector<32x128xf32> -> vector<32x128xf32>
    %13 = vector.broadcast %11 : vector<32x1xf32> to vector<32x128xf32>
    %14 = arith.addf %12, %13 : vector<32x128xf32>
    %15 = math.tanh %14 : vector<32x128xf32>
    %c0_12 = arith.constant 0 : index
    %c0_13 = arith.constant 0 : index
    %16 = vector.load %arg7[%c0_12, %c0_13] : memref<32x32xf32, #tpu.memory_space<vmem>>, vector<32x32xf32>
    %c0_14 = arith.constant 0 : index
    %c0_15 = arith.constant 0 : index
    %17 = vector.load %arg8[%c0_14, %c0_15] : memref<32x1xf32, #tpu.memory_space<vmem>>, vector<32x1xf32>
    %cst_16 = arith.constant dense<0.000000e+00> : vector<32x128xf32>
    %18 = tpu.matmul %16, %15, %cst_16 {dimension_numbers = #tpu.dot_dimension_numbers<[1], [0], [0], [1], [0, 0, 1, 1], [], []>} : vector<32x32xf32>, vector<32x128xf32>, vector<32x128xf32> -> vector<32x128xf32>
    %19 = vector.broadcast %17 : vector<32x1xf32> to vector<32x128xf32>
    %20 = arith.addf %18, %19 : vector<32x128xf32>
    %21 = math.tanh %20 : vector<32x128xf32>
    %c0_17 = arith.constant 0 : index
    %c0_18 = arith.constant 0 : index
    %22 = vector.load %arg9[%c0_17, %c0_18] : memref<16x32xf32, #tpu.memory_space<vmem>>, vector<16x32xf32>
    %c0_19 = arith.constant 0 : index
    %c0_20 = arith.constant 0 : index
    %23 = vector.load %arg10[%c0_19, %c0_20] : memref<16x1xf32, #tpu.memory_space<vmem>>, vector<16x1xf32>
    %cst_21 = arith.constant dense<0.000000e+00> : vector<16x128xf32>
    %24 = tpu.matmul %22, %21, %cst_21 {dimension_numbers = #tpu.dot_dimension_numbers<[1], [0], [0], [1], [0, 0, 1, 1], [], []>} : vector<16x32xf32>, vector<32x128xf32>, vector<16x128xf32> -> vector<16x128xf32>
    %25 = vector.broadcast %23 : vector<16x1xf32> to vector<16x128xf32>
    %26 = arith.addf %24, %25 : vector<16x128xf32>
    %cst_22 = arith.constant 0.000000e+00 : f32
    %27 = vector.broadcast %cst_22 : f32 to vector<32x128xf32>
    %28 = arith.maximumf %8, %27 : vector<32x128xf32>
    %c0_23 = arith.constant 0 : index
    %c0_24 = arith.constant 0 : index
    %29 = vector.load %arg11[%c0_23, %c0_24] : memref<32x32xf32, #tpu.memory_space<vmem>>, vector<32x32xf32>
    %c0_25 = arith.constant 0 : index
    %c0_26 = arith.constant 0 : index
    %30 = vector.load %arg12[%c0_25, %c0_26] : memref<32x1xf32, #tpu.memory_space<vmem>>, vector<32x1xf32>
    %cst_27 = arith.constant dense<0.000000e+00> : vector<32x128xf32>
    %31 = tpu.matmul %29, %28, %cst_27 {dimension_numbers = #tpu.dot_dimension_numbers<[1], [0], [0], [1], [0, 0, 1, 1], [], []>} : vector<32x32xf32>, vector<32x128xf32>, vector<32x128xf32> -> vector<32x128xf32>
    %32 = vector.broadcast %30 : vector<32x1xf32> to vector<32x128xf32>
    %33 = arith.addf %31, %32 : vector<32x128xf32>
    %cst_28 = arith.constant 0.000000e+00 : f32
    %34 = vector.broadcast %cst_28 : f32 to vector<32x128xf32>
    %35 = arith.maximumf %33, %34 : vector<32x128xf32>
    %c0_29 = arith.constant 0 : index
    %c0_30 = arith.constant 0 : index
    %36 = vector.load %arg13[%c0_29, %c0_30] : memref<32x32xf32, #tpu.memory_space<vmem>>, vector<32x32xf32>
    %c0_31 = arith.constant 0 : index
    %c0_32 = arith.constant 0 : index
    %37 = vector.load %arg14[%c0_31, %c0_32] : memref<32x1xf32, #tpu.memory_space<vmem>>, vector<32x1xf32>
    %cst_33 = arith.constant dense<0.000000e+00> : vector<32x128xf32>
    %38 = tpu.matmul %36, %35, %cst_33 {dimension_numbers = #tpu.dot_dimension_numbers<[1], [0], [0], [1], [0, 0, 1, 1], [], []>} : vector<32x32xf32>, vector<32x128xf32>, vector<32x128xf32> -> vector<32x128xf32>
    %39 = vector.broadcast %37 : vector<32x1xf32> to vector<32x128xf32>
    %40 = arith.addf %38, %39 : vector<32x128xf32>
    %cst_34 = arith.constant 0.000000e+00 : f32
    %41 = vector.broadcast %cst_34 : f32 to vector<32x128xf32>
    %42 = arith.maximumf %40, %41 : vector<32x128xf32>
    %c0_35 = arith.constant 0 : index
    %c0_36 = arith.constant 0 : index
    %43 = vector.load %arg15[%c0_35, %c0_36] : memref<16x32xf32, #tpu.memory_space<vmem>>, vector<16x32xf32>
    %c0_37 = arith.constant 0 : index
    %c0_38 = arith.constant 0 : index
    %44 = vector.load %arg16[%c0_37, %c0_38] : memref<16x1xf32, #tpu.memory_space<vmem>>, vector<16x1xf32>
    %cst_39 = arith.constant dense<0.000000e+00> : vector<16x128xf32>
    %45 = tpu.matmul %43, %42, %cst_39 {dimension_numbers = #tpu.dot_dimension_numbers<[1], [0], [0], [1], [0, 0, 1, 1], [], []>} : vector<16x32xf32>, vector<32x128xf32>, vector<16x128xf32> -> vector<16x128xf32>
    %46 = vector.broadcast %44 : vector<16x1xf32> to vector<16x128xf32>
    %47 = arith.addf %45, %46 : vector<16x128xf32>
    %48 = math.tanh %26 : vector<16x128xf32>
    %49 = vector.broadcast %1 : vector<16x1xf32> to vector<16x128xf32>
    %50 = arith.mulf %48, %49 : vector<16x128xf32>
    %51 = vector.broadcast %1 : vector<16x1xf32> to vector<16x128xf32>
    %52 = arith.mulf %47, %51 : vector<16x128xf32>
    %53 = math.exp %50 : vector<16x128xf32>
    %54 = arith.mulf %0, %53 : vector<16x128xf32>
    %55 = arith.addf %54, %52 : vector<16x128xf32>
    %c0_40 = arith.constant 0 : index
    %c0_41 = arith.constant 0 : index
    %56 = vector.load %arg17[%c0_40, %c0_41] : memref<16x128xf32, #tpu.memory_space<vmem>>, vector<16x128xf32>
    tpu.vector_store %arg17[%c0_40, %c0_41], %55 {strides = array<i32>} : memref<16x128xf32, #tpu.memory_space<vmem>>, vector<16x128xf32>,
    %c0_42 = arith.constant 0 : index
    %c0_43 = arith.constant 0 : index
    %57 = vector.load %arg18[%c0_42, %c0_43] : memref<16x128xf32, #tpu.memory_space<vmem>>, vector<16x128xf32>
    tpu.vector_store %arg18[%c0_42, %c0_43], %50 {strides = array<i32>} : memref<16x128xf32, #tpu.memory_space<vmem>>, vector<16x128xf32>,
    return
  }
  func.func @transform_0(%arg0: i32) -> (i32, i32) {
    %c0_i32 = arith.constant 0 : i32
    %c0_i32_0 = arith.constant 0 : i32
    %c0_i32_1 = arith.constant 0 : i32
    return %c0_i32, %c0_i32_0 : i32, i32
  }
  func.func @transform_1(%arg0: i32) -> (i32, i32) {
    %c0_i32 = arith.constant 0 : i32
    %c0_i32_0 = arith.constant 0 : i32
    return %c0_i32, %arg0 : i32, i32
  }
  func.func @transform_2(%arg0: i32) -> (i32, i32) {
    %c0_i32 = arith.constant 0 : i32
    %c0_i32_0 = arith.constant 0 : i32
    %c0_i32_1 = arith.constant 0 : i32
    return %c0_i32, %c0_i32_0 : i32, i32
  }
  func.func @transform_3(%arg0: i32) -> (i32, i32) {
    %c0_i32 = arith.constant 0 : i32
    %c0_i32_0 = arith.constant 0 : i32
    %c0_i32_1 = arith.constant 0 : i32
    return %c0_i32, %c0_i32_0 : i32, i32
  }
  func.func @transform_4(%arg0: i32) -> (i32, i32) {
    %c0_i32 = arith.constant 0 : i32
    %c0_i32_0 = arith.constant 0 : i32
    %c0_i32_1 = arith.constant 0 : i32
    return %c0_i32, %c0_i32_0 : i32, i32
  }
  func.func @transform_5(%arg0: i32) -> (i32, i32) {
    %c0_i32 = arith.constant 0 : i32
    %c0_i32_0 = arith.constant 0 : i32
    %c0_i32_1 = arith.constant 0 : i32
    return %c0_i32, %c0_i32_0 : i32, i32
  }
  func.func @transform_6(%arg0: i32) -> (i32, i32) {
    %c0_i32 = arith.constant 0 : i32
    %c0_i32_0 = arith.constant 0 : i32
    %c0_i32_1 = arith.constant 0 : i32
    return %c0_i32, %c0_i32_0 : i32, i32
  }
  func.func @transform_7(%arg0: i32) -> (i32, i32) {
    %c0_i32 = arith.constant 0 : i32
    %c0_i32_0 = arith.constant 0 : i32
    %c0_i32_1 = arith.constant 0 : i32
    return %c0_i32, %c0_i32_0 : i32, i32
  }
  func.func @transform_8(%arg0: i32) -> (i32, i32) {
    %c0_i32 = arith.constant 0 : i32
    %c0_i32_0 = arith.constant 0 : i32
    %c0_i32_1 = arith.constant 0 : i32
    return %c0_i32, %c0_i32_0 : i32, i32
  }
  func.func @transform_9(%arg0: i32) -> (i32, i32) {
    %c0_i32 = arith.constant 0 : i32
    %c0_i32_0 = arith.constant 0 : i32
    %c0_i32_1 = arith.constant 0 : i32
    return %c0_i32, %c0_i32_0 : i32, i32
  }
  func.func @transform_10(%arg0: i32) -> (i32, i32) {
    %c0_i32 = arith.constant 0 : i32
    %c0_i32_0 = arith.constant 0 : i32
    %c0_i32_1 = arith.constant 0 : i32
    return %c0_i32, %c0_i32_0 : i32, i32
  }
  func.func @transform_11(%arg0: i32) -> (i32, i32) {
    %c0_i32 = arith.constant 0 : i32
    %c0_i32_0 = arith.constant 0 : i32
    %c0_i32_1 = arith.constant 0 : i32
    return %c0_i32, %c0_i32_0 : i32, i32
  }
  func.func @transform_12(%arg0: i32) -> (i32, i32) {
    %c0_i32 = arith.constant 0 : i32
    %c0_i32_0 = arith.constant 0 : i32
    %c0_i32_1 = arith.constant 0 : i32
    return %c0_i32, %c0_i32_0 : i32, i32
  }
  func.func @transform_13(%arg0: i32) -> (i32, i32) {
    %c0_i32 = arith.constant 0 : i32
    %c0_i32_0 = arith.constant 0 : i32
    %c0_i32_1 = arith.constant 0 : i32
    return %c0_i32, %c0_i32_0 : i32, i32
  }
  func.func @transform_14(%arg0: i32) -> (i32, i32) {
    %c0_i32 = arith.constant 0 : i32
    %c0_i32_0 = arith.constant 0 : i32
    %c0_i32_1 = arith.constant 0 : i32
    return %c0_i32, %c0_i32_0 : i32, i32
  }
  func.func @transform_15(%arg0: i32) -> (i32, i32) {
    %c0_i32 = arith.constant 0 : i32
    %c0_i32_0 = arith.constant 0 : i32
    %c0_i32_1 = arith.constant 0 : i32
    return %c0_i32, %c0_i32_0 : i32, i32
  }
  func.func @transform_16(%arg0: i32) -> (i32, i32) {
    %c0_i32 = arith.constant 0 : i32
    %c0_i32_0 = arith.constant 0 : i32
    return %c0_i32, %arg0 : i32, i32
  }
  func.func @transform_17(%arg0: i32) -> (i32, i32) {
    %c0_i32 = arith.constant 0 : i32
    %c0_i32_0 = arith.constant 0 : i32
    return %c0_i32, %arg0 : i32, i32
  }
}

</mosaic_0001>

<llo_original>
// kernel: tpu_custom_call.1
$region0: #{tpu_custom_call.1}
  #allocation0 [shape = 'u32[]', space=smem, size = 0x4, offset = 0x4, fixed_abs, tag = 'smem constant byte address 0x4 - core index']
  #allocation1 [shape = 'u32[144,128]{1,0:T(1,128)}', space=vmem, size = 0x12000, scoped, tag = 'internal scratch']
  %s0 = inlined_call_operand.vmem [shape: f32[16,1], index: 0, kind: input, shape index: {}]
  %s1 = inlined_call_operand.vmem [shape: f32[16,128], index: 1, kind: input, shape index: {}]
  %s2 = inlined_call_operand.vmem [shape: f32[64,16], index: 2, kind: input, shape index: {}]
  %s3 = inlined_call_operand.vmem [shape: f32[64,1], index: 3, kind: input, shape index: {}]
  %s4 = inlined_call_operand.vmem [shape: f32[32,32], index: 4, kind: input, shape index: {}]
  %s5 = inlined_call_operand.vmem [shape: f32[32,1], index: 5, kind: input, shape index: {}]
  %s6 = inlined_call_operand.vmem [shape: f32[32,32], index: 6, kind: input, shape index: {}]
  %s7 = inlined_call_operand.vmem [shape: f32[32,1], index: 7, kind: input, shape index: {}]
  %s8 = inlined_call_operand.vmem [shape: f32[16,32], index: 8, kind: input, shape index: {}]
  %s9 = inlined_call_operand.vmem [shape: f32[16,1], index: 9, kind: input, shape index: {}]
  %s10 = inlined_call_operand.vmem [shape: f32[32,32], index: 10, kind: input, shape index: {}]
  %s11 = inlined_call_operand.vmem [shape: f32[32,1], index: 11, kind: input, shape index: {}]
  %s12 = inlined_call_operand.vmem [shape: f32[32,32], index: 12, kind: input, shape index: {}]
  %s13 = inlined_call_operand.vmem [shape: f32[32,1], index: 13, kind: input, shape index: {}]
  %s14 = inlined_call_operand.vmem [shape: f32[16,32], index: 14, kind: input, shape index: {}]
  %s15 = inlined_call_operand.vmem [shape: f32[16,1], index: 15, kind: input, shape index: {}]
  %s16 = inlined_call_operand.hbm [shape: f32[16,128], index: 16, kind: output, shape index: {0}]
  %s17 = inlined_call_operand.hbm [shape: f32[16,128], index: 17, kind: output, shape index: {1}]
  %18 = xla_tuple %s16, %s17
  %s19 = sld [smem:[#allocation0]]
  $region82: #{tpu_custom_call.1} parent=0
    _
  %s21 = ssub.s32 1, %s19
  %s22 = scalar_select 0, %s21, %s19
  $region1: #{tpu_custom_call.1} parent=0
    #allocation2 [shape = 'u8[8192]{0}', space=vmem, size = 0x2000, scoped, tag = 'output window, operand 0, single buffered']
    #allocation3 [shape = 's32[1]{0}', space=sflag, size = 0x4, scoped, tag = 'scoped memory for tpu_custom_call.1']
    #allocation4 [shape = 'u8[8192]{0}', space=vmem, size = 0x2000, scoped, tag = 'output window, operand 1, single buffered']
    #allocation5 [shape = 's32[1]{0}', space=sflag, size = 0x4, scoped, tag = 'scoped memory for tpu_custom_call.1']
    %23 = vsyncpa [#allocation3], 0
    %24 = vsyncpa [#allocation5], 0
    // Predicated region
    $region2: #{tpu_custom_call.1} parent=1 // pred_check
      _
    $region3: #{tpu_custom_call.1} parent=1 // pred_check_branch
      %26 = sbr.rel (0) target = $region5
    $region4: #{tpu_custom_call.1} parent=1 // pred_region
      _
    $region5: #{tpu_custom_call.1} parent=1 // pred_fallthru
      _
    // Predicated region
    $region6: #{tpu_custom_call.1} parent=1 // pred_check
      _
    $region7: #{tpu_custom_call.1} parent=1 // pred_check_branch
      %28 = sbr.rel (0) target = $region9
    $region8: #{tpu_custom_call.1} parent=1 // pred_region
      _
    $region9: #{tpu_custom_call.1} parent=1 // pred_fallthru
      _
    // Predicated region
    $region10: #{tpu_custom_call.1} parent=1 // pred_check
      _
    $region11: #{tpu_custom_call.1} parent=1 // pred_check_branch
      %30 = sbr.rel (0) target = $region13
    $region12: #{tpu_custom_call.1} parent=1 // pred_region
      _
    $region13: #{tpu_custom_call.1} parent=1 // pred_fallthru
      _
    // Predicated region
    $region14: #{tpu_custom_call.1} parent=1 // pred_check
      _
    $region15: #{tpu_custom_call.1} parent=1 // pred_check_branch
      %32 = sbr.rel (0) target = $region17
    $region16: #{tpu_custom_call.1} parent=1 // pred_region
      _
    $region17: #{tpu_custom_call.1} parent=1 // pred_fallthru
      _
    // Predicated region
    $region18: #{tpu_custom_call.1} parent=1 // pred_check
      _
    $region19: #{tpu_custom_call.1} parent=1 // pred_check_branch
      %34 = sbr.rel (0) target = $region21
    $region20: #{tpu_custom_call.1} parent=1 // pred_region
      _
    $region21: #{tpu_custom_call.1} parent=1 // pred_fallthru
      _
    // Predicated region
    $region22: #{tpu_custom_call.1} parent=1 // pred_check
      _
    $region23: #{tpu_custom_call.1} parent=1 // pred_check_branch
      %36 = sbr.rel (0) target = $region25
    $region24: #{tpu_custom_call.1} parent=1 // pred_region
      _
    $region25: #{tpu_custom_call.1} parent=1 // pred_fallthru
      _
    // Predicated region
    $region26: #{tpu_custom_call.1} parent=1 // pred_check
      _
    $region27: #{tpu_custom_call.1} parent=1 // pred_check_branch
      %38 = sbr.rel (0) target = $region29
    $region28: #{tpu_custom_call.1} parent=1 // pred_region
      _
    $region29: #{tpu_custom_call.1} parent=1 // pred_fallthru
      _
    // Predicated region
    $region30: #{tpu_custom_call.1} parent=1 // pred_check
      _
    $region31: #{tpu_custom_call.1} parent=1 // pred_check_branch
      %40 = sbr.rel (0) target = $region33
    $region32: #{tpu_custom_call.1} parent=1 // pred_region
      _
    $region33: #{tpu_custom_call.1} parent=1 // pred_fallthru
      _
    // Predicated region
    $region34: #{tpu_custom_call.1} parent=1 // pred_check
      _
    $region35: #{tpu_custom_call.1} parent=1 // pred_check_branch
      %42 = sbr.rel (0) target = $region37
    $region36: #{tpu_custom_call.1} parent=1 // pred_region
      _
    $region37: #{tpu_custom_call.1} parent=1 // pred_fallthru
      _
    // Predicated region
    $region38: #{tpu_custom_call.1} parent=1 // pred_check
      _
    $region39: #{tpu_custom_call.1} parent=1 // pred_check_branch
      %44 = sbr.rel (0) target = $region41
    $region40: #{tpu_custom_call.1} parent=1 // pred_region
      _
    $region41: #{tpu_custom_call.1} parent=1 // pred_fallthru
      _
    // Predicated region
    $region42: #{tpu_custom_call.1} parent=1 // pred_check
      _
    $region43: #{tpu_custom_call.1} parent=1 // pred_check_branch
      %46 = sbr.rel (0) target = $region45
    $region44: #{tpu_custom_call.1} parent=1 // pred_region
      _
    $region45: #{tpu_custom_call.1} parent=1 // pred_fallthru
      _
    // Predicated region
    $region46: #{tpu_custom_call.1} parent=1 // pred_check
      _
    $region47: #{tpu_custom_call.1} parent=1 // pred_check_branch
      %48 = sbr.rel (0) target = $region49
    $region48: #{tpu_custom_call.1} parent=1 // pred_region
      _
    $region49: #{tpu_custom_call.1} parent=1 // pred_fallthru
      _
    // Predicated region
    $region50: #{tpu_custom_call.1} parent=1 // pred_check
      _
    $region51: #{tpu_custom_call.1} parent=1 // pred_check_branch
      %50 = sbr.rel (0) target = $region53
    $region52: #{tpu_custom_call.1} parent=1 // pred_region
      _
    $region53: #{tpu_custom_call.1} parent=1 // pred_fallthru
      _
    // Predicated region
    $region54: #{tpu_custom_call.1} parent=1 // pred_check
      _
    $region55: #{tpu_custom_call.1} parent=1 // pred_check_branch
      %52 = sbr.rel (0) target = $region57
    $region56: #{tpu_custom_call.1} parent=1 // pred_region
      _
    $region57: #{tpu_custom_call.1} parent=1 // pred_fallthru
      _
    // Predicated region
    $region58: #{tpu_custom_call.1} parent=1 // pred_check
      _
    $region59: #{tpu_custom_call.1} parent=1 // pred_check_branch
      %54 = sbr.rel (0) target = $region61
    $region60: #{tpu_custom_call.1} parent=1 // pred_region
      _
    $region61: #{tpu_custom_call.1} parent=1 // pred_fallthru
      _
    // Predicated region
    $region62: #{tpu_custom_call.1} parent=1 // pred_check
      _
    $region63: #{tpu_custom_call.1} parent=1 // pred_check_branch
      %56 = sbr.rel (0) target = $region65
    $region64: #{tpu_custom_call.1} parent=1 // pred_region
      _
    $region65: #{tpu_custom_call.1} parent=1 // pred_fallthru
      _
    %v57 = vld [vmem:[%s1] sm:$0xff]
    %v58 = vld [vmem:[%s1 + $0x8] sm:$0xff]
    %v59 = vld [vmem:[%s0] sm:$0xff]
    %v60 = vld [vmem:[%s0 + $0x8] sm:$0xff]
    %v61 = vld [vmem:[%s2] sm:$0xff]
    %v62 = vld [vmem:[%s2 + $0x8] sm:$0xff]
    %v63 = vld [vmem:[%s2 + $0x10] sm:$0xff]
    %v64 = vld [vmem:[%s2 + $0x18] sm:$0xff]
    %v65 = vld [vmem:[%s2 + $0x20] sm:$0xff]
    %v66 = vld [vmem:[%s2 + $0x28] sm:$0xff]
    %v67 = vld [vmem:[%s2 + $0x30] sm:$0xff]
    %v68 = vld [vmem:[%s2 + $0x38] sm:$0xff]
    %v69 = vld [vmem:[%s3] sm:$0xff]
    %v70 = vld [vmem:[%s3 + $0x8] sm:$0xff]
    %v71 = vld [vmem:[%s3 + $0x10] sm:$0xff]
    %v72 = vld [vmem:[%s3 + $0x18] sm:$0xff]
    %v73 = vld [vmem:[%s3 + $0x20] sm:$0xff]
    %v74 = vld [vmem:[%s3 + $0x28] sm:$0xff]
    %v75 = vld [vmem:[%s3 + $0x30] sm:$0xff]
    %v76 = vld [vmem:[%s3 + $0x38] sm:$0xff]
    %78 = vset.pattern.permute.xlu0 0
    %79 = vperm.xlu0 %78, %v69
    %v80 = vpop.permute.xlu0 %79
    %83 = vset.pattern.permute.xlu0 0
    %84 = vperm.xlu0 %83, %v70
    %v85 = vpop.permute.xlu0 %84
    %88 = vset.pattern.permute.xlu0 0
    %89 = vperm.xlu0 %88, %v71
    %v90 = vpop.permute.xlu0 %89
    %93 = vset.pattern.permute.xlu0 0
    %94 = vperm.xlu0 %93, %v72
    %v95 = vpop.permute.xlu0 %94
    %98 = vset.pattern.permute.xlu0 0
    %99 = vperm.xlu0 %98, %v73
    %v100 = vpop.permute.xlu0 %99
    %103 = vset.pattern.permute.xlu0 0
    %104 = vperm.xlu0 %103, %v74
    %v105 = vpop.permute.xlu0 %104
    %108 = vset.pattern.permute.xlu0 0
    %109 = vperm.xlu0 %108, %v75
    %v110 = vpop.permute.xlu0 %109
    %113 = vset.pattern.permute.xlu0 0
    %114 = vperm.xlu0 %113, %v76
    %v115 = vpop.permute.xlu0 %114
    %vm117 = vcmask 130048
    %v119 = vsel %vm117, %v61, 0
    %v122 = vsel %vm117, %v62, 0
    %v125 = vsel %vm117, %v63, 0
    %v128 = vsel %vm117, %v64, 0
    %v131 = vsel %vm117, %v65, 0
    %v134 = vsel %vm117, %v66, 0
    %v137 = vsel %vm117, %v67, 0
    %v140 = vsel %vm117, %v68, 0
    %142 = vmatprep.subr.mxu0 0.0
    %143 = vmatpush1.msra.mxu0 %v57
    %144 = vmatprep.subr.mxu0 0.0
    %145 = vmatpush1.msra.mxu0 %v58
    %146 = vmatprep.subr.mxu0 0.0
    %147 = vmatpush1.msra.mxu0 0.0
    %148 = vmatprep.subr.mxu0 0.0
    %149 = vmatpush1.msra.mxu0 0.0
    %150 = vmatprep.subr.mxu0 0.0
    %151 = vmatpush1.msra.mxu0 0.0
    %152 = vmatprep.subr.mxu0 0.0
    %153 = vmatpush1.msra.mxu0 0.0
    %154 = vmatprep.subr.mxu0 0.0
    %155 = vmatpush1.msra.mxu0 0.0
    %156 = vmatprep.subr.mxu0 0.0
    %157 = vmatpush1.msra.mxu0 0.0
    %158 = vmatprep.subr.mxu0 0.0
    %159 = vmatpush1.msra.mxu0 0.0
    %160 = vmatprep.subr.mxu0 0.0
    %161 = vmatpush1.msra.mxu0 0.0
    %162 = vmatprep.subr.mxu0 0.0
    %163 = vmatpush1.msra.mxu0 0.0
    %164 = vmatprep.subr.mxu0 0.0
    %165 = vmatpush1.msra.mxu0 0.0
    %166 = vmatprep.subr.mxu0 0.0
    %167 = vmatpush1.msra.mxu0 0.0
    %168 = vmatprep.subr.mxu0 0.0
    %169 = vmatpush1.msra.mxu0 0.0
    %170 = vmatprep.subr.mxu0 0.0
    %171 = vmatpush1.msra.mxu0 0.0
    %172 = vmatprep.subr.mxu0 0.0
    %173 = vmatpush1.msra.mxu0 0.0
    %174 = vmatprep.subr.mxu0 0.0
    %175 = vmatpush1.msra.mxu0 0.0
    %176 = vmatprep.subr.mxu0 0.0
    %177 = vmatpush1.msra.mxu0 0.0
    %178 = vmatprep.subr.mxu0 0.0
    %179 = vmatpush1.msra.mxu0 0.0
    %180 = vmatprep.subr.mxu0 0.0
    %181 = vmatpush1.msra.mxu0 0.0
    %182 = vmatprep.subr.mxu0 0.0
    %183 = vmatpush1.msra.mxu0 0.0
    %184 = vmatprep.subr.mxu0 0.0
    %185 = vmatpush1.msra.mxu0 0.0
    %186 = vmatprep.subr.mxu0 0.0
    %187 = vmatpush1.msra.mxu0 0.0
    %188 = vmatprep.subr.mxu0 0.0
    %189 = vmatpush1.msra.mxu0 0.0
    %190 = vmatprep.subr.mxu0 0.0
    %191 = vmatpush1.msra.mxu0 0.0
    %192 = vmatprep.subr.mxu0 0.0
    %193 = vmatpush1.msra.mxu0 0.0
    %194 = vmatprep.subr.mxu0 0.0
    %195 = vmatpush1.msra.mxu0 0.0
    %196 = vmatprep.subr.mxu0 0.0
    %197 = vmatpush1.msra.mxu0 0.0
    %198 = vmatprep.subr.mxu0 0.0
    %199 = vmatpush1.msra.mxu0 0.0
    %200 = vmatprep.subr.mxu0 0.0
    %201 = vmatpush1.msra.mxu0 0.0
    %202 = vmatprep.subr.mxu0 0.0
    %203 = vmatpush1.msra.mxu0 0.0
    %204 = vmatprep.subr.mxu0 0.0
    %205 = vmatpush1.msra.mxu0 0.0
    %206 = vmatprep.mubr.f32.mxu0 0.0
    %207 = vmatmul.mubr.f32.gmra.mrb[0].mxu0 %v119
    %v208 = vpop.f32.mrb[0].mxu0
    %v209 = vadd.f32 %v80, %v208
    %v210 = vpop.f32.mrb[0].mxu0
    %211 = vmatprep.mubr.f32.mxu0 0.0
    %212 = vmatmul.mubr.f32.gmra.mrb[0].mxu0 %v122
    %v213 = vpop.f32.mrb[0].mxu0
    %v214 = vadd.f32 %v85, %v213
    %v215 = vpop.f32.mrb[0].mxu0
    %216 = vmatprep.mubr.f32.mxu0 0.0
    %217 = vmatmul.mubr.f32.gmra.mrb[0].mxu0 %v125
    %v218 = vpop.f32.mrb[0].mxu0
    %v219 = vadd.f32 %v90, %v218
    %v220 = vpop.f32.mrb[0].mxu0
    %221 = vmatprep.mubr.f32.mxu0 0.0
    %222 = vmatmul.mubr.f32.gmra.mrb[0].mxu0 %v128
    %v223 = vpop.f32.mrb[0].mxu0
    %v224 = vadd.f32 %v95, %v223
    %v225 = vpop.f32.mrb[0].mxu0
    %226 = vmatprep.mubr.f32.mxu0 0.0
    %227 = vmatmul.mubr.f32.gmra.mrb[0].mxu0 %v131
    %v228 = vpop.f32.mrb[0].mxu0
    %v229 = vadd.f32 %v100, %v228
    %v230 = vpop.f32.mrb[0].mxu0
    %231 = vmatprep.mubr.f32.mxu0 0.0
    %232 = vmatmul.mubr.f32.gmra.mrb[0].mxu0 %v134
    %v233 = vpop.f32.mrb[0].mxu0
    %v234 = vadd.f32 %v105, %v233
    %v235 = vpop.f32.mrb[0].mxu0
    %236 = vmatprep.mubr.f32.mxu0 0.0
    %237 = vmatmul.mubr.f32.gmra.mrb[0].mxu0 %v137
    %v238 = vpop.f32.mrb[0].mxu0
    %v239 = vadd.f32 %v110, %v238
    %v240 = vpop.f32.mrb[0].mxu0
    %241 = vmatprep.mubr.f32.mxu0 0.0
    %242 = vmatmul.mubr.f32.gmra.mrb[0].mxu0 %v140
    %v243 = vpop.f32.mrb[0].mxu0
    %v244 = vadd.f32 %v115, %v243
    %v245 = vpop.f32.mrb[0].mxu0
    %246 = vdwg.mxu0
    %v247 = vtanh.pop %v209
    %v248 = vtanh.pop %v214
    %v249 = vtanh.pop %v219
    %v250 = vtanh.pop %v224
    %v251 = vld [vmem:[%s4] sm:$0xff]
    %v252 = vld [vmem:[%s4 + $0x8] sm:$0xff]
    %v253 = vld [vmem:[%s4 + $0x10] sm:$0xff]
    %v254 = vld [vmem:[%s4 + $0x18] sm:$0xff]
    %v255 = vld [vmem:[%s5] sm:$0xff]
    %v256 = vld [vmem:[%s5 + $0x8] sm:$0xff]
    %v257 = vld [vmem:[%s5 + $0x10] sm:$0xff]
    %v258 = vld [vmem:[%s5 + $0x18] sm:$0xff]
    %260 = vset.pattern.permute.xlu0 0
    %261 = vperm.xlu0 %260, %v255
    %v262 = vpop.permute.xlu0 %261
    %265 = vset.pattern.permute.xlu0 0
    %266 = vperm.xlu0 %265, %v256
    %v267 = vpop.permute.xlu0 %266
    %270 = vset.pattern.permute.xlu0 0
    %271 = vperm.xlu0 %270, %v257
    %v272 = vpop.permute.xlu0 %271
    %275 = vset.pattern.permute.xlu0 0
    %276 = vperm.xlu0 %275, %v258
    %v277 = vpop.permute.xlu0 %276
    %vm279 = vcmask 261120
    %v281 = vsel %vm279, %v251, 0
    %v284 = vsel %vm279, %v252, 0
    %v287 = vsel %vm279, %v253, 0
    %v290 = vsel %vm279, %v254, 0
    %292 = vmatprep.subr.mxu0 0.0
    %293 = vmatpush1.msra.mxu0 %v247
    %294 = vmatprep.subr.mxu0 0.0
    %295 = vmatpush1.msra.mxu0 %v248
    %296 = vmatprep.subr.mxu0 0.0
    %297 = vmatpush1.msra.mxu0 %v249
    %298 = vmatprep.subr.mxu0 0.0
    %299 = vmatpush1.msra.mxu0 %v250
    %300 = vmatprep.subr.mxu0 0.0
    %301 = vmatpush1.msra.mxu0 0.0
    %302 = vmatprep.subr.mxu0 0.0
    %303 = vmatpush1.msra.mxu0 0.0
    %304 = vmatprep.subr.mxu0 0.0
    %305 = vmatpush1.msra.mxu0 0.0
    %306 = vmatprep.subr.mxu0 0.0
    %307 = vmatpush1.msra.mxu0 0.0
    %308 = vmatprep.subr.mxu0 0.0
    %309 = vmatpush1.msra.mxu0 0.0
    %310 = vmatprep.subr.mxu0 0.0
    %311 = vmatpush1.msra.mxu0 0.0
    %312 = vmatprep.subr.mxu0 0.0
    %313 = vmatpush1.msra.mxu0 0.0
    %314 = vmatprep.subr.mxu0 0.0
    %315 = vmatpush1.msra.mxu0 0.0
    %316 = vmatprep.subr.mxu0 0.0
    %317 = vmatpush1.msra.mxu0 0.0
    %318 = vmatprep.subr.mxu0 0.0
    %319 = vmatpush1.msra.mxu0 0.0
    %320 = vmatprep.subr.mxu0 0.0
    %321 = vmatpush1.msra.mxu0 0.0
    %322 = vmatprep.subr.mxu0 0.0
    %323 = vmatpush1.msra.mxu0 0.0
    %324 = vmatprep.subr.mxu0 0.0
    %325 = vmatpush1.msra.mxu0 0.0
    %326 = vmatprep.subr.mxu0 0.0
    %327 = vmatpush1.msra.mxu0 0.0
    %328 = vmatprep.subr.mxu0 0.0
    %329 = vmatpush1.msra.mxu0 0.0
    %330 = vmatprep.subr.mxu0 0.0
    %331 = vmatpush1.msra.mxu0 0.0
    %332 = vmatprep.subr.mxu0 0.0
    %333 = vmatpush1.msra.mxu0 0.0
    %334 = vmatprep.subr.mxu0 0.0
    %335 = vmatpush1.msra.mxu0 0.0
    %336 = vmatprep.subr.mxu0 0.0
    %337 = vmatpush1.msra.mxu0 0.0
    %338 = vmatprep.subr.mxu0 0.0
    %339 = vmatpush1.msra.mxu0 0.0
    %340 = vmatprep.subr.mxu0 0.0
    %341 = vmatpush1.msra.mxu0 0.0
    %342 = vmatprep.subr.mxu0 0.0
    %343 = vmatpush1.msra.mxu0 0.0
    %344 = vmatprep.subr.mxu0 0.0
    %345 = vmatpush1.msra.mxu0 0.0
    %346 = vmatprep.subr.mxu0 0.0
    %347 = vmatpush1.msra.mxu0 0.0
    %348 = vmatprep.subr.mxu0 0.0
    %349 = vmatpush1.msra.mxu0 0.0
    %350 = vmatprep.subr.mxu0 0.0
    %351 = vmatpush1.msra.mxu0 0.0
    %352 = vmatprep.subr.mxu0 0.0
    %353 = vmatpush1.msra.mxu0 0.0
    %354 = vmatprep.subr.mxu0 0.0
    %355 = vmatpush1.msra.mxu0 0.0
    %356 = vmatprep.mubr.f32.mxu0 0.0
    %357 = vmatmul.mubr.f32.gmra.mrb[0].mxu0 %v281
    %v358 = vpop.f32.mrb[0].mxu0
    %v359 = vadd.f32 %v262, %v358
    %v360 = vpop.f32.mrb[0].mxu0
    %361 = vmatprep.mubr.f32.mxu0 0.0
    %362 = vmatmul.mubr.f32.gmra.mrb[0].mxu0 %v284
    %v363 = vpop.f32.mrb[0].mxu0
    %v364 = vadd.f32 %v267, %v363
    %v365 = vpop.f32.mrb[0].mxu0
    %366 = vmatprep.mubr.f32.mxu0 0.0
    %367 = vmatmul.mubr.f32.gmra.mrb[0].mxu0 %v287
    %v368 = vpop.f32.mrb[0].mxu0
    %v369 = vadd.f32 %v272, %v368
    %v370 = vpop.f32.mrb[0].mxu0
    %371 = vmatprep.mubr.f32.mxu0 0.0
    %372 = vmatmul.mubr.f32.gmra.mrb[0].mxu0 %v290
    %v373 = vpop.f32.mrb[0].mxu0
    %v374 = vadd.f32 %v277, %v373
    %v375 = vpop.f32.mrb[0].mxu0
    %376 = vdwg.mxu0
    %v377 = vtanh.pop %v359
    %v378 = vtanh.pop %v364
    %v379 = vtanh.pop %v369
    %v380 = vtanh.pop %v374
    %v381 = vld [vmem:[%s6] sm:$0xff]
    %v382 = vld [vmem:[%s6 + $0x8] sm:$0xff]
    %v383 = vld [vmem:[%s6 + $0x10] sm:$0xff]
    %v384 = vld [vmem:[%s6 + $0x18] sm:$0xff]
    %v385 = vld [vmem:[%s7] sm:$0xff]
    %v386 = vld [vmem:[%s7 + $0x8] sm:$0xff]
    %v387 = vld [vmem:[%s7 + $0x10] sm:$0xff]
    %v388 = vld [vmem:[%s7 + $0x18] sm:$0xff]
    %390 = vset.pattern.permute.xlu0 0
    %391 = vperm.xlu0 %390, %v385
    %v392 = vpop.permute.xlu0 %391
    %395 = vset.pattern.permute.xlu0 0
    %396 = vperm.xlu0 %395, %v386
    %v397 = vpop.permute.xlu0 %396
    %400 = vset.pattern.permute.xlu0 0
    %401 = vperm.xlu0 %400, %v387
    %v402 = vpop.permute.xlu0 %401
    %405 = vset.pattern.permute.xlu0 0
    %406 = vperm.xlu0 %405, %v388
    %v407 = vpop.permute.xlu0 %406
    %v410 = vsel %vm279, %v381, 0
    %v413 = vsel %vm279, %v382, 0
    %v416 = vsel %vm279, %v383, 0
    %v419 = vsel %vm279, %v384, 0
    %421 = vmatprep.subr.mxu0 0.0
    %422 = vmatpush1.msra.mxu0 %v377
    %423 = vmatprep.subr.mxu0 0.0
    %424 = vmatpush1.msra.mxu0 %v378
    %425 = vmatprep.subr.mxu0 0.0
    %426 = vmatpush1.msra.mxu0 %v379
    %427 = vmatprep.subr.mxu0 0.0
    %428 = vmatpush1.msra.mxu0 %v380
    %429 = vmatprep.subr.mxu0 0.0
    %430 = vmatpush1.msra.mxu0 0.0
    %431 = vmatprep.subr.mxu0 0.0
    %432 = vmatpush1.msra.mxu0 0.0
    %433 = vmatprep.subr.mxu0 0.0
    %434 = vmatpush1.msra.mxu0 0.0
    %435 = vmatprep.subr.mxu0 0.0
    %436 = vmatpush1.msra.mxu0 0.0
    %437 = vmatprep.subr.mxu0 0.0
    %438 = vmatpush1.msra.mxu0 0.0
    %439 = vmatprep.subr.mxu0 0.0
    %440 = vmatpush1.msra.mxu0 0.0
    %441 = vmatprep.subr.mxu0 0.0
    %442 = vmatpush1.msra.mxu0 0.0
    %443 = vmatprep.subr.mxu0 0.0
    %444 = vmatpush1.msra.mxu0 0.0
    %445 = vmatprep.subr.mxu0 0.0
    %446 = vmatpush1.msra.mxu0 0.0
    %447 = vmatprep.subr.mxu0 0.0
    %448 = vmatpush1.msra.mxu0 0.0
    %449 = vmatprep.subr.mxu0 0.0
    %450 = vmatpush1.msra.mxu0 0.0
    %451 = vmatprep.subr.mxu0 0.0
    %452 = vmatpush1.msra.mxu0 0.0
    %453 = vmatprep.subr.mxu0 0.0
    %454 = vmatpush1.msra.mxu0 0.0
    %455 = vmatprep.subr.mxu0 0.0
    %456 = vmatpush1.msra.mxu0 0.0
    %457 = vmatprep.subr.mxu0 0.0
    %458 = vmatpush1.msra.mxu0 0.0
    %459 = vmatprep.subr.mxu0 0.0
    %460 = vmatpush1.msra.mxu0 0.0
    %461 = vmatprep.subr.mxu0 0.0
    %462 = vmatpush1.msra.mxu0 0.0
    %463 = vmatprep.subr.mxu0 0.0
    %464 = vmatpush1.msra.mxu0 0.0
    %465 = vmatprep.subr.mxu0 0.0
    %466 = vmatpush1.msra.mxu0 0.0
    %467 = vmatprep.subr.mxu0 0.0
    %468 = vmatpush1.msra.mxu0 0.0
    %469 = vmatprep.subr.mxu0 0.0
    %470 = vmatpush1.msra.mxu0 0.0
    %471 = vmatprep.subr.mxu0 0.0
    %472 = vmatpush1.msra.mxu0 0.0
    %473 = vmatprep.subr.mxu0 0.0
    %474 = vmatpush1.msra.mxu0 0.0
    %475 = vmatprep.subr.mxu0 0.0
    %476 = vmatpush1.msra.mxu0 0.0
    %477 = vmatprep.subr.mxu0 0.0
    %478 = vmatpush1.msra.mxu0 0.0
    %479 = vmatprep.subr.mxu0 0.0
    %480 = vmatpush1.msra.mxu0 0.0
    %481 = vmatprep.subr.mxu0 0.0
    %482 = vmatpush1.msra.mxu0 0.0
    %483 = vmatprep.subr.mxu0 0.0
    %484 = vmatpush1.msra.mxu0 0.0
    %485 = vmatprep.mubr.f32.mxu0 0.0
    %486 = vmatmul.mubr.f32.gmra.mrb[0].mxu0 %v410
    %v487 = vpop.f32.mrb[0].mxu0
    %v488 = vadd.f32 %v392, %v487
    %v489 = vpop.f32.mrb[0].mxu0
    %490 = vmatprep.mubr.f32.mxu0 0.0
    %491 = vmatmul.mubr.f32.gmra.mrb[0].mxu0 %v413
    %v492 = vpop.f32.mrb[0].mxu0
    %v493 = vadd.f32 %v397, %v492
    %v494 = vpop.f32.mrb[0].mxu0
    %495 = vmatprep.mubr.f32.mxu0 0.0
    %496 = vmatmul.mubr.f32.gmra.mrb[0].mxu0 %v416
    %v497 = vpop.f32.mrb[0].mxu0
    %v498 = vadd.f32 %v402, %v497
    %v499 = vpop.f32.mrb[0].mxu0
    %500 = vmatprep.mubr.f32.mxu0 0.0
    %501 = vmatmul.mubr.f32.gmra.mrb[0].mxu0 %v419
    %v502 = vpop.f32.mrb[0].mxu0
    %v503 = vadd.f32 %v407, %v502
    %v504 = vpop.f32.mrb[0].mxu0
    %505 = vdwg.mxu0
    %v506 = vtanh.pop %v488
    %v507 = vtanh.pop %v493
    %v508 = vtanh.pop %v498
    %v509 = vtanh.pop %v503
    %v510 = vld [vmem:[%s8] sm:$0xff]
    %v511 = vld [vmem:[%s8 + $0x8] sm:$0xff]
    %v512 = vld [vmem:[%s9] sm:$0xff]
    %v513 = vld [vmem:[%s9 + $0x8] sm:$0xff]
    %515 = vset.pattern.permute.xlu0 0
    %516 = vperm.xlu0 %515, %v512
    %v517 = vpop.permute.xlu0 %516
    %520 = vset.pattern.permute.xlu0 0
    %521 = vperm.xlu0 %520, %v513
    %v522 = vpop.permute.xlu0 %521
    %v525 = vsel %vm279, %v510, 0
    %v528 = vsel %vm279, %v511, 0
    %530 = vmatprep.subr.mxu0 0.0
    %531 = vmatpush1.msra.mxu0 %v506
    %532 = vmatprep.subr.mxu0 0.0
    %533 = vmatpush1.msra.mxu0 %v507
    %534 = vmatprep.subr.mxu0 0.0
    %535 = vmatpush1.msra.mxu0 %v508
    %536 = vmatprep.subr.mxu0 0.0
    %537 = vmatpush1.msra.mxu0 %v509
    %538 = vmatprep.subr.mxu0 0.0
    %539 = vmatpush1.msra.mxu0 0.0
    %540 = vmatprep.subr.mxu0 0.0
    %541 = vmatpush1.msra.mxu0 0.0
    %542 = vmatprep.subr.mxu0 0.0
    %543 = vmatpush1.msra.mxu0 0.0
    %544 = vmatprep.subr.mxu0 0.0
    %545 = vmatpush1.msra.mxu0 0.0
    %546 = vmatprep.subr.mxu0 0.0
    %547 = vmatpush1.msra.mxu0 0.0
    %548 = vmatprep.subr.mxu0 0.0
    %549 = vmatpush1.msra.mxu0 0.0
    %550 = vmatprep.subr.mxu0 0.0
    %551 = vmatpush1.msra.mxu0 0.0
    %552 = vmatprep.subr.mxu0 0.0
    %553 = vmatpush1.msra.mxu0 0.0
    %554 = vmatprep.subr.mxu0 0.0
    %555 = vmatpush1.msra.mxu0 0.0
    %556 = vmatprep.subr.mxu0 0.0
    %557 = vmatpush1.msra.mxu0 0.0
    %558 = vmatprep.subr.mxu0 0.0
    %559 = vmatpush1.msra.mxu0 0.0
    %560 = vmatprep.subr.mxu0 0.0
    %561 = vmatpush1.msra.mxu0 0.0
    %562 = vmatprep.subr.mxu0 0.0
    %563 = vmatpush1.msra.mxu0 0.0
    %564 = vmatprep.subr.mxu0 0.0
    %565 = vmatpush1.msra.mxu0 0.0
    %566 = vmatprep.subr.mxu0 0.0
    %567 = vmatpush1.msra.mxu0 0.0
    %568 = vmatprep.subr.mxu0 0.0
    %569 = vmatpush1.msra.mxu0 0.0
    %570 = vmatprep.subr.mxu0 0.0
    %571 = vmatpush1.msra.mxu0 0.0
    %572 = vmatprep.subr.mxu0 0.0
    %573 = vmatpush1.msra.mxu0 0.0
    %574 = vmatprep.subr.mxu0 0.0
    %575 = vmatpush1.msra.mxu0 0.0
    %576 = vmatprep.subr.mxu0 0.0
    %577 = vmatpush1.msra.mxu0 0.0
    %578 = vmatprep.subr.mxu0 0.0
    %579 = vmatpush1.msra.mxu0 0.0
    %580 = vmatprep.subr.mxu0 0.0
    %581 = vmatpush1.msra.mxu0 0.0
    %582 = vmatprep.subr.mxu0 0.0
    %583 = vmatpush1.msra.mxu0 0.0
    %584 = vmatprep.subr.mxu0 0.0
    %585 = vmatpush1.msra.mxu0 0.0
    %586 = vmatprep.subr.mxu0 0.0
    %587 = vmatpush1.msra.mxu0 0.0
    %588 = vmatprep.subr.mxu0 0.0
    %589 = vmatpush1.msra.mxu0 0.0
    %590 = vmatprep.subr.mxu0 0.0
    %591 = vmatpush1.msra.mxu0 0.0
    %592 = vmatprep.subr.mxu0 0.0
    %593 = vmatpush1.msra.mxu0 0.0
    %594 = vmatprep.mubr.f32.mxu0 0.0
    %595 = vmatmul.mubr.f32.gmra.mrb[0].mxu0 %v525
    %v596 = vpop.f32.mrb[0].mxu0
    %v597 = vadd.f32 %v517, %v596
    %v598 = vpop.f32.mrb[0].mxu0
    %599 = vmatprep.mubr.f32.mxu0 0.0
    %600 = vmatmul.mubr.f32.gmra.mrb[0].mxu0 %v528
    %v601 = vpop.f32.mrb[0].mxu0
    %v602 = vadd.f32 %v522, %v601
    %v603 = vpop.f32.mrb[0].mxu0
    %604 = vdwg.mxu0
    %v605 = vmax.f32 %v229, 0.0
    %v606 = vmax.f32 %v234, 0.0
    %v607 = vmax.f32 %v239, 0.0
    %v608 = vmax.f32 %v244, 0.0
    %v609 = vld [vmem:[%s10] sm:$0xff]
    %v610 = vld [vmem:[%s10 + $0x8] sm:$0xff]
    %v611 = vld [vmem:[%s10 + $0x10] sm:$0xff]
    %v612 = vld [vmem:[%s10 + $0x18] sm:$0xff]
    %v613 = vld [vmem:[%s11] sm:$0xff]
    %v614 = vld [vmem:[%s11 + $0x8] sm:$0xff]
    %v615 = vld [vmem:[%s11 + $0x10] sm:$0xff]
    %v616 = vld [vmem:[%s11 + $0x18] sm:$0xff]
    %618 = vset.pattern.permute.xlu0 0
    %619 = vperm.xlu0 %618, %v613
    %v620 = vpop.permute.xlu0 %619
    %623 = vset.pattern.permute.xlu0 0
    %624 = vperm.xlu0 %623, %v614
    %v625 = vpop.permute.xlu0 %624
    %628 = vset.pattern.permute.xlu0 0
    %629 = vperm.xlu0 %628, %v615
    %v630 = vpop.permute.xlu0 %629
    %633 = vset.pattern.permute.xlu0 0
    %634 = vperm.xlu0 %633, %v616
    %v635 = vpop.permute.xlu0 %634
    %v638 = vsel %vm279, %v609, 0
    %v641 = vsel %vm279, %v610, 0
    %v644 = vsel %vm279, %v611, 0
    %v647 = vsel %vm279, %v612, 0
    %649 = vmatprep.subr.mxu0 0.0
    %650 = vmatpush1.msra.mxu0 %v605
    %651 = vmatprep.subr.mxu0 0.0
    %652 = vmatpush1.msra.mxu0 %v606
    %653 = vmatprep.subr.mxu0 0.0
    %654 = vmatpush1.msra.mxu0 %v607
    %655 = vmatprep.subr.mxu0 0.0
    %656 = vmatpush1.msra.mxu0 %v608
    %657 = vmatprep.subr.mxu0 0.0
    %658 = vmatpush1.msra.mxu0 0.0
    %659 = vmatprep.subr.mxu0 0.0
    %660 = vmatpush1.msra.mxu0 0.0
    %661 = vmatprep.subr.mxu0 0.0
    %662 = vmatpush1.msra.mxu0 0.0
    %663 = vmatprep.subr.mxu0 0.0
    %664 = vmatpush1.msra.mxu0 0.0
    %665 = vmatprep.subr.mxu0 0.0
    %666 = vmatpush1.msra.mxu0 0.0
    %667 = vmatprep.subr.mxu0 0.0
    %668 = vmatpush1.msra.mxu0 0.0
    %669 = vmatprep.subr.mxu0 0.0
    %670 = vmatpush1.msra.mxu0 0.0
    %671 = vmatprep.subr.mxu0 0.0
    %672 = vmatpush1.msra.mxu0 0.0
    %673 = vmatprep.subr.mxu0 0.0
    %674 = vmatpush1.msra.mxu0 0.0
    %675 = vmatprep.subr.mxu0 0.0
    %676 = vmatpush1.msra.mxu0 0.0
    %677 = vmatprep.subr.mxu0 0.0
    %678 = vmatpush1.msra.mxu0 0.0
    %679 = vmatprep.subr.mxu0 0.0
    %680 = vmatpush1.msra.mxu0 0.0
    %681 = vmatprep.subr.mxu0 0.0
    %682 = vmatpush1.msra.mxu0 0.0
    %683 = vmatprep.subr.mxu0 0.0
    %684 = vmatpush1.msra.mxu0 0.0
    %685 = vmatprep.subr.mxu0 0.0
    %686 = vmatpush1.msra.mxu0 0.0
    %687 = vmatprep.subr.mxu0 0.0
    %688 = vmatpush1.msra.mxu0 0.0
    %689 = vmatprep.subr.mxu0 0.0
    %690 = vmatpush1.msra.mxu0 0.0
    %691 = vmatprep.subr.mxu0 0.0
    %692 = vmatpush1.msra.mxu0 0.0
    %693 = vmatprep.subr.mxu0 0.0
    %694 = vmatpush1.msra.mxu0 0.0
    %695 = vmatprep.subr.mxu0 0.0
    %696 = vmatpush1.msra.mxu0 0.0
    %697 = vmatprep.subr.mxu0 0.0
    %698 = vmatpush1.msra.mxu0 0.0
    %699 = vmatprep.subr.mxu0 0.0
    %700 = vmatpush1.msra.mxu0 0.0
    %701 = vmatprep.subr.mxu0 0.0
    %702 = vmatpush1.msra.mxu0 0.0
    %703 = vmatprep.subr.mxu0 0.0
    %704 = vmatpush1.msra.mxu0 0.0
    %705 = vmatprep.subr.mxu0 0.0
    %706 = vmatpush1.msra.mxu0 0.0
    %707 = vmatprep.subr.mxu0 0.0
    %708 = vmatpush1.msra.mxu0 0.0
    %709 = vmatprep.subr.mxu0 0.0
    %710 = vmatpush1.msra.mxu0 0.0
    %711 = vmatprep.subr.mxu0 0.0
    %712 = vmatpush1.msra.mxu0 0.0
    %713 = vmatprep.mubr.f32.mxu0 0.0
    %714 = vmatmul.mubr.f32.gmra.mrb[0].mxu0 %v638
    %v715 = vpop.f32.mrb[0].mxu0
    %v716 = vadd.f32 %v620, %v715
    %v717 = vpop.f32.mrb[0].mxu0
    %718 = vmatprep.mubr.f32.mxu0 0.0
    %719 = vmatmul.mubr.f32.gmra.mrb[0].mxu0 %v641
    %v720 = vpop.f32.mrb[0].mxu0
    %v721 = vadd.f32 %v625, %v720
    %v722 = vpop.f32.mrb[0].mxu0
    %723 = vmatprep.mubr.f32.mxu0 0.0
    %724 = vmatmul.mubr.f32.gmra.mrb[0].mxu0 %v644
    %v725 = vpop.f32.mrb[0].mxu0
    %v726 = vadd.f32 %v630, %v725
    %v727 = vpop.f32.mrb[0].mxu0
    %728 = vmatprep.mubr.f32.mxu0 0.0
    %729 = vmatmul.mubr.f32.gmra.mrb[0].mxu0 %v647
    %v730 = vpop.f32.mrb[0].mxu0
    %v731 = vadd.f32 %v635, %v730
    %v732 = vpop.f32.mrb[0].mxu0
    %733 = vdwg.mxu0
    %v734 = vmax.f32 %v716, 0.0
    %v735 = vmax.f32 %v721, 0.0
    %v736 = vmax.f32 %v726, 0.0
    %v737 = vmax.f32 %v731, 0.0
    %v738 = vld [vmem:[%s12] sm:$0xff]
    %v739 = vld [vmem:[%s12 + $0x8] sm:$0xff]
    %v740 = vld [vmem:[%s12 + $0x10] sm:$0xff]
    %v741 = vld [vmem:[%s12 + $0x18] sm:$0xff]
    %v742 = vld [vmem:[%s13] sm:$0xff]
    %v743 = vld [vmem:[%s13 + $0x8] sm:$0xff]
    %v744 = vld [vmem:[%s13 + $0x10] sm:$0xff]
    %v745 = vld [vmem:[%s13 + $0x18] sm:$0xff]
    %747 = vset.pattern.permute.xlu0 0
    %748 = vperm.xlu0 %747, %v742
    %v749 = vpop.permute.xlu0 %748
    %752 = vset.pattern.permute.xlu0 0
    %753 = vperm.xlu0 %752, %v743
    %v754 = vpop.permute.xlu0 %753
    %757 = vset.pattern.permute.xlu0 0
    %758 = vperm.xlu0 %757, %v744
    %v759 = vpop.permute.xlu0 %758
    %762 = vset.pattern.permute.xlu0 0
    %763 = vperm.xlu0 %762, %v745
    %v764 = vpop.permute.xlu0 %763
    %v767 = vsel %vm279, %v738, 0
    %v770 = vsel %vm279, %v739, 0
    %v773 = vsel %vm279, %v740, 0
    %v776 = vsel %vm279, %v741, 0
    %778 = vmatprep.subr.mxu0 0.0
    %779 = vmatpush1.msra.mxu0 %v734
    %780 = vmatprep.subr.mxu0 0.0
    %781 = vmatpush1.msra.mxu0 %v735
    %782 = vmatprep.subr.mxu0 0.0
    %783 = vmatpush1.msra.mxu0 %v736
    %784 = vmatprep.subr.mxu0 0.0
    %785 = vmatpush1.msra.mxu0 %v737
    %786 = vmatprep.subr.mxu0 0.0
    %787 = vmatpush1.msra.mxu0 0.0
    %788 = vmatprep.subr.mxu0 0.0
    %789 = vmatpush1.msra.mxu0 0.0
    %790 = vmatprep.subr.mxu0 0.0
    %791 = vmatpush1.msra.mxu0 0.0
    %792 = vmatprep.subr.mxu0 0.0
    %793 = vmatpush1.msra.mxu0 0.0
    %794 = vmatprep.subr.mxu0 0.0
    %795 = vmatpush1.msra.mxu0 0.0
    %796 = vmatprep.subr.mxu0 0.0
    %797 = vmatpush1.msra.mxu0 0.0
    %798 = vmatprep.subr.mxu0 0.0
    %799 = vmatpush1.msra.mxu0 0.0
    %800 = vmatprep.subr.mxu0 0.0
    %801 = vmatpush1.msra.mxu0 0.0
    %802 = vmatprep.subr.mxu0 0.0
    %803 = vmatpush1.msra.mxu0 0.0
    %804 = vmatprep.subr.mxu0 0.0
    %805 = vmatpush1.msra.mxu0 0.0
    %806 = vmatprep.subr.mxu0 0.0
    %807 = vmatpush1.msra.mxu0 0.0
    %808 = vmatprep.subr.mxu0 0.0
    %809 = vmatpush1.msra.mxu0 0.0
    %810 = vmatprep.subr.mxu0 0.0
    %811 = vmatpush1.msra.mxu0 0.0
    %812 = vmatprep.subr.mxu0 0.0
    %813 = vmatpush1.msra.mxu0 0.0
    %814 = vmatprep.subr.mxu0 0.0
    %815 = vmatpush1.msra.mxu0 0.0
    %816 = vmatprep.subr.mxu0 0.0
    %817 = vmatpush1.msra.mxu0 0.0
    %818 = vmatprep.subr.mxu0 0.0
    %819 = vmatpush1.msra.mxu0 0.0
    %820 = vmatprep.subr.mxu0 0.0
    %821 = vmatpush1.msra.mxu0 0.0
    %822 = vmatprep.subr.mxu0 0.0
    %823 = vmatpush1.msra.mxu0 0.0
    %824 = vmatprep.subr.mxu0 0.0
    %825 = vmatpush1.msra.mxu0 0.0
    %826 = vmatprep.subr.mxu0 0.0
    %827 = vmatpush1.msra.mxu0 0.0
    %828 = vmatprep.subr.mxu0 0.0
    %829 = vmatpush1.msra.mxu0 0.0
    %830 = vmatprep.subr.mxu0 0.0
    %831 = vmatpush1.msra.mxu0 0.0
    %832 = vmatprep.subr.mxu0 0.0
    %833 = vmatpush1.msra.mxu0 0.0
    %834 = vmatprep.subr.mxu0 0.0
    %835 = vmatpush1.msra.mxu0 0.0
    %836 = vmatprep.subr.mxu0 0.0
    %837 = vmatpush1.msra.mxu0 0.0
    %838 = vmatprep.subr.mxu0 0.0
    %839 = vmatpush1.msra.mxu0 0.0
    %840 = vmatprep.subr.mxu0 0.0
    %841 = vmatpush1.msra.mxu0 0.0
    %842 = vmatprep.mubr.f32.mxu0 0.0
    %843 = vmatmul.mubr.f32.gmra.mrb[0].mxu0 %v767
    %v844 = vpop.f32.mrb[0].mxu0
    %v845 = vadd.f32 %v749, %v844
    %v846 = vpop.f32.mrb[0].mxu0
    %847 = vmatprep.mubr.f32.mxu0 0.0
    %848 = vmatmul.mubr.f32.gmra.mrb[0].mxu0 %v770
    %v849 = vpop.f32.mrb[0].mxu0
    %v850 = vadd.f32 %v754, %v849
    %v851 = vpop.f32.mrb[0].mxu0
    %852 = vmatprep.mubr.f32.mxu0 0.0
    %853 = vmatmul.mubr.f32.gmra.mrb[0].mxu0 %v773
    %v854 = vpop.f32.mrb[0].mxu0
    %v855 = vadd.f32 %v759, %v854
    %v856 = vpop.f32.mrb[0].mxu0
    %857 = vmatprep.mubr.f32.mxu0 0.0
    %858 = vmatmul.mubr.f32.gmra.mrb[0].mxu0 %v776
    %v859 = vpop.f32.mrb[0].mxu0
    %v860 = vadd.f32 %v764, %v859
    %v861 = vpop.f32.mrb[0].mxu0
    %862 = vdwg.mxu0
    %v863 = vmax.f32 %v845, 0.0
    %v864 = vmax.f32 %v850, 0.0
    %v865 = vmax.f32 %v855, 0.0
    %v866 = vmax.f32 %v860, 0.0
    %v867 = vld [vmem:[%s14] sm:$0xff]
    %v868 = vld [vmem:[%s14 + $0x8] sm:$0xff]
    %v869 = vld [vmem:[%s15] sm:$0xff]
    %v870 = vld [vmem:[%s15 + $0x8] sm:$0xff]
    %872 = vset.pattern.permute.xlu0 0
    %873 = vperm.xlu0 %872, %v869
    %v874 = vpop.permute.xlu0 %873
    %877 = vset.pattern.permute.xlu0 0
    %878 = vperm.xlu0 %877, %v870
    %v879 = vpop.permute.xlu0 %878
    %v882 = vsel %vm279, %v867, 0
    %v885 = vsel %vm279, %v868, 0
    %887 = vmatprep.subr.mxu0 0.0
    %888 = vmatpush1.msra.mxu0 %v863
    %889 = vmatprep.subr.mxu0 0.0
    %890 = vmatpush1.msra.mxu0 %v864
    %891 = vmatprep.subr.mxu0 0.0
    %892 = vmatpush1.msra.mxu0 %v865
    %893 = vmatprep.subr.mxu0 0.0
    %894 = vmatpush1.msra.mxu0 %v866
    %895 = vmatprep.subr.mxu0 0.0
    %896 = vmatpush1.msra.mxu0 0.0
    %897 = vmatprep.subr.mxu0 0.0
    %898 = vmatpush1.msra.mxu0 0.0
    %899 = vmatprep.subr.mxu0 0.0
    %900 = vmatpush1.msra.mxu0 0.0
    %901 = vmatprep.subr.mxu0 0.0
    %902 = vmatpush1.msra.mxu0 0.0
    %903 = vmatprep.subr.mxu0 0.0
    %904 = vmatpush1.msra.mxu0 0.0
    %905 = vmatprep.subr.mxu0 0.0
    %906 = vmatpush1.msra.mxu0 0.0
    %907 = vmatprep.subr.mxu0 0.0
    %908 = vmatpush1.msra.mxu0 0.0
    %909 = vmatprep.subr.mxu0 0.0
    %910 = vmatpush1.msra.mxu0 0.0
    %911 = vmatprep.subr.mxu0 0.0
    %912 = vmatpush1.msra.mxu0 0.0
    %913 = vmatprep.subr.mxu0 0.0
    %914 = vmatpush1.msra.mxu0 0.0
    %915 = vmatprep.subr.mxu0 0.0
    %916 = vmatpush1.msra.mxu0 0.0
    %917 = vmatprep.subr.mxu0 0.0
    %918 = vmatpush1.msra.mxu0 0.0
    %919 = vmatprep.subr.mxu0 0.0
    %920 = vmatpush1.msra.mxu0 0.0
    %921 = vmatprep.subr.mxu0 0.0
    %922 = vmatpush1.msra.mxu0 0.0
    %923 = vmatprep.subr.mxu0 0.0
    %924 = vmatpush1.msra.mxu0 0.0
    %925 = vmatprep.subr.mxu0 0.0
    %926 = vmatpush1.msra.mxu0 0.0
    %927 = vmatprep.subr.mxu0 0.0
    %928 = vmatpush1.msra.mxu0 0.0
    %929 = vmatprep.subr.mxu0 0.0
    %930 = vmatpush1.msra.mxu0 0.0
    %931 = vmatprep.subr.mxu0 0.0
    %932 = vmatpush1.msra.mxu0 0.0
    %933 = vmatprep.subr.mxu0 0.0
    %934 = vmatpush1.msra.mxu0 0.0
    %935 = vmatprep.subr.mxu0 0.0
    %936 = vmatpush1.msra.mxu0 0.0
    %937 = vmatprep.subr.mxu0 0.0
    %938 = vmatpush1.msra.mxu0 0.0
    %939 = vmatprep.subr.mxu0 0.0
    %940 = vmatpush1.msra.mxu0 0.0
    %941 = vmatprep.subr.mxu0 0.0
    %942 = vmatpush1.msra.mxu0 0.0
    %943 = vmatprep.subr.mxu0 0.0
    %944 = vmatpush1.msra.mxu0 0.0
    %945 = vmatprep.subr.mxu0 0.0
    %946 = vmatpush1.msra.mxu0 0.0
    %947 = vmatprep.subr.mxu0 0.0
    %948 = vmatpush1.msra.mxu0 0.0
    %949 = vmatprep.subr.mxu0 0.0
    %950 = vmatpush1.msra.mxu0 0.0
    %951 = vmatprep.mubr.f32.mxu0 0.0
    %952 = vmatmul.mubr.f32.gmra.mrb[0].mxu0 %v882
    %v953 = vpop.f32.mrb[0].mxu0
    %v954 = vadd.f32 %v874, %v953
    %v955 = vpop.f32.mrb[0].mxu0
    %956 = vmatprep.mubr.f32.mxu0 0.0
    %957 = vmatmul.mubr.f32.gmra.mrb[0].mxu0 %v885
    %v958 = vpop.f32.mrb[0].mxu0
    %v959 = vadd.f32 %v879, %v958
    %v960 = vpop.f32.mrb[0].mxu0
    %961 = vdwg.mxu0
    %v962 = vtanh.pop %v597
    %v963 = vtanh.pop %v602
    %965 = vset.pattern.permute.xlu0 0
    %966 = vperm.xlu0 %965, %v59
    %v967 = vpop.permute.xlu0 %966
    %970 = vset.pattern.permute.xlu0 0
    %971 = vperm.xlu0 %970, %v60
    %v972 = vpop.permute.xlu0 %971
    %v974 = vmul.f32 %v962, %v967
    %v975 = vmul.f32 %v963, %v972
    %v976 = vmul.f32 %v954, %v967
    %v977 = vmul.f32 %v959, %v972
    %v978 = vmul.f32 %v974, 1.442695
    %v979 = vpow.pop %v978
    %v980 = vmul.f32 %v975, 1.442695
    %v981 = vpow.pop %v980
    %v982 = vmul.f32 %v57, %v979
    %v983 = vmul.f32 %v58, %v981
    %v984 = vadd.f32 %v982, %v976
    %v985 = vadd.f32 %v983, %v977
    %986 = vst [vmem:[#allocation2] sm:$0xff] %v984
    %987 = vst [vmem:[#allocation2 + $0x8] sm:$0xff] %v985
    %988 = vst [vmem:[#allocation4] sm:$0xff] %v974
    %989 = vst [vmem:[#allocation4 + $0x8] sm:$0xff] %v975
    // Predicated region
    $region66: #{tpu_custom_call.1} parent=1 // pred_check
      _
    $region67: #{tpu_custom_call.1} parent=1 // pred_check_branch
      %991 = sbr.rel (0) target = $region69
    $region68: #{tpu_custom_call.1} parent=1 // pred_region
      %s993 = ssub.s32 256, 256
      %994 = vsyncadd [#allocation3], %s993
      %s995 = sshll.u32 [#allocation2], 4
      %s996 = int_to_ptr.vmem [resolvable:$true] %s995
      %1001 = dma.vmem_to_hbm [thread:$0]  %s996, 256, %s16, [#allocation3], 128, 128, 8
    $region69: #{tpu_custom_call.1} parent=1 // pred_fallthru
      _
    // Predicated region
    $region70: #{tpu_custom_call.1} parent=1 // pred_check
      _
    $region71: #{tpu_custom_call.1} parent=1 // pred_check_branch
      %1003 = sbr.rel (0) target = $region73
    $region72: #{tpu_custom_call.1} parent=1 // pred_region
      %s1005 = ssub.s32 256, 256
      %1006 = vsyncadd [#allocation5], %s1005
      %s1007 = sshll.u32 [#allocation4], 4
      %s1008 = int_to_ptr.vmem [resolvable:$true] %s1007
      %1013 = dma.vmem_to_hbm [thread:$0]  %s1008, 256, %s17, [#allocation5], 128, 128, 8
    $region73: #{tpu_custom_call.1} parent=1 // pred_fallthru
      _
    // Predicated region
    $region74: #{tpu_custom_call.1} parent=1 // pred_check
      _
    $region75: #{tpu_custom_call.1} parent=1 // pred_check_branch
      %1015 = sbr.rel (0) target = $region77
    $region76: #{tpu_custom_call.1} parent=1 // pred_region
      %1016 = dma.done [#allocation3], 256
    $region77: #{tpu_custom_call.1} parent=1 // pred_fallthru
      _
    // Predicated region
    $region78: #{tpu_custom_call.1} parent=1 // pred_check
      _
    $region79: #{tpu_custom_call.1} parent=1 // pred_check_branch
      %1018 = sbr.rel (0) target = $region81
    $region80: #{tpu_custom_call.1} parent=1 // pred_region
      %1019 = dma.done [#allocation5], 256
    $region81: #{tpu_custom_call.1} parent=1 // pred_fallthru
      _
    %1020 = vsyncpa [#allocation3], 1
    %1021 = vsyncpa [#allocation5], 1

</llo_original>
